<compile_context>
chip_gen: v7x
topology: tpu7x:2x2x1
jax: 0.10.0
libtpu: 0.0.40
codegen_flags: <defaults>
</compile_context>

<pallas_src>
import jax
import jax.numpy as jnp
from jax.experimental import pallas as pl
from jax.experimental.pallas import tpu as pltpu

NEG_BIG = -1.0e12  # matches torch masked_fill value -1000000000000.0


def _attn_intent_kernel(hid_ref, out_ref, mask_ref, ctx_ref):
    # hid_ref : (TB, H), out_ref : (TB, L, H), mask_ref : (TB, L) i32, ctx_ref : (TB, H)
    out_nat = out_ref[...]                      # native dtype, single VMEM read
    hid_nat = hid_ref[...]                      # (TB, H)
    msk = mask_ref[...]                         # (TB, L), 1 == masked out

    # Attention energies: per-row dot(outputs[b, l, :], hidden[b, :]).
    # VPU multiply in the native dtype, f32 accumulation over the lane axis.
    scores = jnp.sum(out_nat * hid_nat[:, None, :], axis=-1, dtype=jnp.float32)
    scores = jnp.where(msk != 0, jnp.float32(NEG_BIG), scores)   # (TB, L)

    # Numerically-stable softmax over L, exact normalization (f32).
    m = jnp.max(scores, axis=-1, keepdims=True)
    e = jnp.exp(scores - m)
    alpha = e / jnp.sum(e, axis=-1, keepdims=True)               # (TB, L) f32

    # Context: sum_L alpha[b, l] * outputs[b, l, :].  alpha is cast down to the
    # input dtype (it is only (TB, L)); products accumulate in f32.
    alpha_nat = alpha.astype(out_nat.dtype)
    ctx = jnp.sum(alpha_nat[:, :, None] * out_nat, axis=1, dtype=jnp.float32)
    ctx_ref[...] = ctx.astype(ctx_ref.dtype)


def _vmem_capacity_bytes():
    try:
        return int(pltpu.get_tpu_info().vmem_capacity_bytes)
    except Exception:
        return 64 * 1024 * 1024  # conservative fallback (v7x per-TensorCore)


def _choose_tb(B, L, H, itemsize):
    """Batch-block size: big enough to amortize the ~0.35us per-grid-step
    overhead (4-8 MiB outputs block), small enough that the full footprint
    (double-buffered outputs + f32 temporaries + small blocks) fits VMEM,
    capped so the grid has >= 2 steps for v7x megacore sharding."""
    align = 16 if itemsize < 4 else 8
    row_bytes = L * H * itemsize
    vmem_bytes = _vmem_capacity_bytes()

    # DMA-efficiency target for the dominant (outputs) stream.
    target_block_bytes = max(4 << 20, min(8 << 20, vmem_bytes // 16))

    # Full per-row VMEM cost of a grid step: 2x outputs rows (double buffer),
    # f32 temporaries for the two contractions, hidden/ctx/mask rows.
    per_row_vmem = 2 * row_bytes + 2 * L * H * 4 + 4 * H * itemsize + 2 * L * 4
    vmem_budget = vmem_bytes // 3

    tb = min(target_block_bytes // row_bytes, vmem_budget // per_row_vmem)
    tb = int(max(1, tb))
    # TODO(synk): if even a handful of rows blow the VMEM budget (very long L),
    # add a second grid axis over L (marked "arbitrary", last) with scratch
    # accumulators / online softmax instead of clamping tb here.

    # Keep at least 2 grid steps when B allows so the "parallel" batch axis is
    # sharded across both TensorCores on v7x (harmless on 1-TC v5e/v6e).
    if B >= 2 * align:
        half = max(align, ((B + 1) // 2) // align * align)
        tb = min(tb, half)

    if tb >= B:
        return B
    return max(align, (tb // align) * align)


def attn_intent(hidden, outputs, mask):
    """hidden: (B, 1, H), outputs: (B, L, H) (any float dtype, kept native),
    mask: (B, L) bool (True == masked out).  Returns context (B, H) in the
    dtype of `outputs` (matches the PyTorch module)."""
    B, L, H = outputs.shape
    dtype = outputs.dtype
    itemsize = jnp.dtype(dtype).itemsize

    hidden2d = hidden.reshape(B, H)      # metadata-only reshape
    mask_i = mask.astype(jnp.int32)      # tiny vs outputs traffic
    # TODO(synk): if callers can provide per-row valid lengths instead of an
    # arbitrary boolean mask, use PrefetchScalarGridSpec scalar prefetch +
    # broadcasted_iota in-kernel and drop this (small) mask DMA entirely.

    tb = _choose_tb(B, L, H, itemsize)
    grid = (pl.cdiv(B, tb),)
    # Note: if tb does not divide B, the padded rows of the last block compute
    # on garbage but rows are independent (per-row softmax), so valid rows are
    # unaffected and Pallas drops out-of-range output writes.

    # Scoped-VMEM limit covering the full per-step footprint with 2x headroom,
    # capped at 3/4 of physical VMEM.
    out_block = tb * L * H * itemsize
    footprint = (2 * out_block                 # double-buffered outputs block
                 + 2 * tb * L * H * 4          # f32 temporaries (2 contractions)
                 + 4 * tb * H * itemsize       # hidden + ctx blocks (buffered)
                 + 2 * tb * L * 4              # mask block
                 + (1 << 20))                  # compiler scratch slack
    vmem_limit = int(min(_vmem_capacity_bytes() * 3 // 4,
                         max(32 << 20, 2 * footprint)))

    cost = pl.CostEstimate(
        flops=4 * B * L * H,                   # 2 muls + 2 adds per element
        transcendentals=B * L,                 # exp
        bytes_accessed=B * L * H * itemsize + 2 * B * H * itemsize + B * L * 4,
    )

    ctx = pl.pallas_call(
        _attn_intent_kernel,
        out_shape=jax.ShapeDtypeStruct((B, H), dtype),
        grid_spec=pltpu.PrefetchScalarGridSpec(
            num_scalar_prefetch=0,
            grid=grid,
            in_specs=[
                pl.BlockSpec((tb, H), lambda b: (b, 0)),         # hidden
                pl.BlockSpec((tb, L, H), lambda b: (b, 0, 0)),   # outputs
                pl.BlockSpec((tb, L), lambda b: (b, 0)),         # mask
            ],
            out_specs=pl.BlockSpec((tb, H), lambda b: (b, 0)),
        ),
        compiler_params=pltpu.CompilerParams(
            dimension_semantics=("parallel",),   # megacore sharding on v7x
            vmem_limit_bytes=vmem_limit),
        cost_estimate=cost,
    )(hidden2d, outputs, mask_i)
    return ctx


def _reference(hidden, outputs, mask):
    # Plain-JAX mirror of the PyTorch forward (f32 math) for verification.
    B, L, H = outputs.shape
    hid = hidden.reshape(B, H, 1).astype(jnp.float32)
    out_f = outputs.astype(jnp.float32)
    scores = jnp.matmul(out_f, hid)[..., 0]                      # (B, L)
    scores = jnp.where(mask, NEG_BIG, scores)
    alpha = jax.nn.softmax(scores, axis=-1)                      # (B, L)
    return jnp.einsum("bl,blh->bh", alpha, out_f).astype(outputs.dtype)


if __name__ == "__main__":
    B, L, H = 2, 8, 32
    key = jax.random.PRNGKey(0)
    k1, k2 = jax.random.split(key)

    hidden = jax.random.normal(k1, (B, 1, H), dtype=jnp.float32)
    outputs = jax.random.normal(k2, (B, L, H), dtype=jnp.float32)
    # mask True == position is masked out (e.g. padding beyond sequence length)
    lengths = jnp.array([L, 5], dtype=jnp.int32)
    mask = jnp.arange(L)[None, :] >= lengths[:, None]            # (B, L) bool

    ctx = attn_intent(hidden, outputs, mask)
    jax.block_until_ready(ctx)

    ref = _reference(hidden, outputs, mask)
    assert ctx.shape == (B, H)
    assert bool(jnp.allclose(ctx, ref, atol=1e-3, rtol=1e-3)), "mismatch vs reference"

    print("KERNEL_OK")
</pallas_src>

<mosaic_0001>
module attributes {stable_mosaic.version = 11 : i64} {
  func.func @_attn_intent_kernel(%arg0: i32, %arg1: memref<2x32xf32, #tpu.memory_space<vmem>>, %arg2: memref<2x8x32xf32, #tpu.memory_space<vmem>>, %arg3: memref<2x8xi32, #tpu.memory_space<vmem>>, %arg4: memref<2x32xf32, #tpu.memory_space<vmem>>) attributes {dimension_semantics = [#tpu.dimension_semantics<parallel>], iteration_bounds = array<i64: 1>, scalar_prefetch = 0 : i64, scratch_operands = 0 : i64, tpu.core_type = #tpu.core_type<tc>, window_params = [{transform_indices = @transform_0, window_bounds = array<i64: 2, 32>}, {transform_indices = @transform_1, window_bounds = array<i64: 2, 8, 32>}, {transform_indices = @transform_2, window_bounds = array<i64: 2, 8>}, {transform_indices = @transform_3, window_bounds = array<i64: 2, 32>}]} {
    %c0 = arith.constant 0 : index
    %c0_0 = arith.constant 0 : index
    %c0_1 = arith.constant 0 : index
    %0 = vector.load %arg2[%c0, %c0_0, %c0_1] : memref<2x8x32xf32, #tpu.memory_space<vmem>>, vector<2x8x32xf32>
    %c0_2 = arith.constant 0 : index
    %c0_3 = arith.constant 0 : index
    %1 = vector.load %arg1[%c0_2, %c0_3] : memref<2x32xf32, #tpu.memory_space<vmem>>, vector<2x32xf32>
    %c0_4 = arith.constant 0 : index
    %c0_5 = arith.constant 0 : index
    %2 = vector.load %arg3[%c0_4, %c0_5] : memref<2x8xi32, #tpu.memory_space<vmem>>, vector<2x8xi32>
    %3 = vector.shape_cast %1 : vector<2x32xf32> to vector<2x1x32xf32>
    %4 = vector.broadcast %3 : vector<2x1x32xf32> to vector<2x8x32xf32>
    %5 = arith.mulf %0, %4 : vector<2x8x32xf32>
    %cst = arith.constant dense<0.000000e+00> : vector<2x8xf32>
    %6 = vector.multi_reduction <add>, %5, %cst [2] : vector<2x8x32xf32> to vector<2x8xf32>
    %c0_i32 = arith.constant 0 : i32
    %7 = vector.broadcast %c0_i32 : i32 to vector<2x8xi32>
    %8 = arith.cmpi ne, %2, %7 : vector<2x8xi32>
    %cst_6 = arith.constant -9.99999995E+11 : f32
    %9 = vector.broadcast %cst_6 : f32 to vector<2x8xf32>
    %10 = arith.select %8, %9, %6 : vector<2x8xi1>, vector<2x8xf32>
    %cst_7 = arith.constant dense<0xFF800000> : vector<2xf32>
    %11 = vector.multi_reduction <maximumf>, %10, %cst_7 [1] : vector<2x8xf32> to vector<2xf32>
    %12 = vector.shape_cast %11 : vector<2xf32> to vector<2x1xf32>
    %13 = vector.broadcast %12 : vector<2x1xf32> to vector<2x8xf32>
    %14 = arith.subf %10, %13 : vector<2x8xf32>
    %15 = math.exp %14 : vector<2x8xf32>
    %cst_8 = arith.constant dense<0.000000e+00> : vector<2xf32>
    %16 = vector.multi_reduction <add>, %15, %cst_8 [1] : vector<2x8xf32> to vector<2xf32>
    %17 = vector.shape_cast %16 : vector<2xf32> to vector<2x1xf32>
    %18 = vector.broadcast %17 : vector<2x1xf32> to vector<2x8xf32>
    %19 = arith.divf %15, %18 : vector<2x8xf32>
    %20 = vector.shape_cast %19 : vector<2x8xf32> to vector<2x8x1xf32>
    %21 = vector.broadcast %20 : vector<2x8x1xf32> to vector<2x8x32xf32>
    %22 = arith.mulf %21, %0 : vector<2x8x32xf32>
    %cst_9 = arith.constant dense<0.000000e+00> : vector<2x32xf32>
    %23 = vector.multi_reduction <add>, %22, %cst_9 [1] : vector<2x8x32xf32> to vector<2x32xf32>
    %c0_10 = arith.constant 0 : index
    %c0_11 = arith.constant 0 : index
    %24 = vector.load %arg4[%c0_10, %c0_11] : memref<2x32xf32, #tpu.memory_space<vmem>>, vector<2x32xf32>
    tpu.vector_store %arg4[%c0_10, %c0_11], %23 {strides = array<i32>} : memref<2x32xf32, #tpu.memory_space<vmem>>, vector<2x32xf32>,
    return
  }
  func.func @transform_0(%arg0: i32) -> (i32, i32) {
    %c0_i32 = arith.constant 0 : i32
    %c0_i32_0 = arith.constant 0 : i32
    return %arg0, %c0_i32 : i32, i32
  }
  func.func @transform_1(%arg0: i32) -> (i32, i32, i32) {
    %c0_i32 = arith.constant 0 : i32
    %c0_i32_0 = arith.constant 0 : i32
    %c0_i32_1 = arith.constant 0 : i32
    return %arg0, %c0_i32, %c0_i32_0 : i32, i32, i32
  }
  func.func @transform_2(%arg0: i32) -> (i32, i32) {
    %c0_i32 = arith.constant 0 : i32
    %c0_i32_0 = arith.constant 0 : i32
    return %arg0, %c0_i32 : i32, i32
  }
  func.func @transform_3(%arg0: i32) -> (i32, i32) {
    %c0_i32 = arith.constant 0 : i32
    %c0_i32_0 = arith.constant 0 : i32
    return %arg0, %c0_i32 : i32, i32
  }
}

</mosaic_0001>

<llo_original>
// kernel: tpu_custom_call.1
$region0: #{tpu_custom_call.1}
  #allocation0 [shape = 'u32[]', space=smem, size = 0x4, offset = 0x4, fixed_abs, tag = 'smem constant byte address 0x4 - core index']
  #allocation1 [shape = 'u32[144,128]{1,0:T(1,128)}', space=vmem, size = 0x12000, scoped, tag = 'internal scratch']
  %s0 = inlined_call_operand.hbm [shape: f32[2,32], index: 0, kind: input, shape index: {}]
  %s1 = inlined_call_operand.hbm [shape: f32[2,8,32], index: 1, kind: input, shape index: {}]
  %s2 = inlined_call_operand.vmem [shape: s32[2,8], index: 2, kind: input, shape index: {}]
  %s3 = inlined_call_operand.hbm [shape: f32[2,32], index: 3, kind: output, shape index: {}]
  %s4 = sld [smem:[#allocation0]]
  $region30: #{tpu_custom_call.1} parent=0
    _
  %s6 = ssub.s32 1, %s4
  %s7 = scalar_select 0, %s6, %s4
  $region1: #{tpu_custom_call.1} parent=0
    #allocation2 [shape = 'u8[1024]{0}', space=vmem, size = 0x400, scoped, tag = 'input window, operand 0, single buffered']
    #allocation3 [shape = 's32[1]{0}', space=sflag, size = 0x4, scoped, tag = 'scoped memory for tpu_custom_call.1']
    #allocation4 [shape = 's32[1]{0}', space=sflag, size = 0x4, scoped, tag = 'scoped memory for tpu_custom_call.1']
    #allocation5 [shape = 'u8[8192]{0}', space=vmem, size = 0x2000, scoped, tag = 'input window, operand 1, single buffered']
    #allocation6 [shape = 's32[1]{0}', space=sflag, size = 0x4, scoped, tag = 'scoped memory for tpu_custom_call.1']
    #allocation7 [shape = 'u8[1024]{0}', space=vmem, size = 0x400, scoped, tag = 'output window, operand 0, single buffered']
    %8 = vsyncpa [#allocation3], 0
    %9 = vsyncpa [#allocation6], 0
    %10 = vsyncpa [#allocation4], 0
    // Predicated region
    $region2: #{tpu_custom_call.1} parent=1 // pred_check
      _
    $region3: #{tpu_custom_call.1} parent=1 // pred_check_branch
      %12 = sbr.rel (0) target = $region5
    $region4: #{tpu_custom_call.1} parent=1 // pred_region
      %s14 = ssub.s32 32, 32
      %15 = vsyncadd [#allocation3], %s14
      %s17 = sshll.u32 [#allocation2], 4
      %s18 = int_to_ptr.vmem [resolvable:$true] %s17
      %20 = dma.hbm_to_vmem [thread:$0]  %s0, 32, %s18, [#allocation3]
    $region5: #{tpu_custom_call.1} parent=1 // pred_fallthru
      _
    // Predicated region
    $region6: #{tpu_custom_call.1} parent=1 // pred_check
      _
    $region7: #{tpu_custom_call.1} parent=1 // pred_check_branch
      %22 = sbr.rel (0) target = $region9
    $region8: #{tpu_custom_call.1} parent=1 // pred_region
      %s24 = ssub.s32 256, 256
      %25 = vsyncadd [#allocation6], %s24
      %s26 = sshll.u32 [#allocation5], 4
      %s27 = int_to_ptr.vmem [resolvable:$true] %s26
      %32 = dma.hbm_to_vmem [thread:$0]  %s1, 256, %s27, [#allocation6], 128, 128, 8
    $region9: #{tpu_custom_call.1} parent=1 // pred_fallthru
      _
    // Predicated region
    $region10: #{tpu_custom_call.1} parent=1 // pred_check
      _
    $region11: #{tpu_custom_call.1} parent=1 // pred_check_branch
      %34 = sbr.rel (0) target = $region13
    $region12: #{tpu_custom_call.1} parent=1 // pred_region
      _
    $region13: #{tpu_custom_call.1} parent=1 // pred_fallthru
      _
    // Predicated region
    $region14: #{tpu_custom_call.1} parent=1 // pred_check
      _
    $region15: #{tpu_custom_call.1} parent=1 // pred_check_branch
      %36 = sbr.rel (0) target = $region17
    $region16: #{tpu_custom_call.1} parent=1 // pred_region
      %37 = dma.done [#allocation3], 32
    $region17: #{tpu_custom_call.1} parent=1 // pred_fallthru
      _
    // Predicated region
    $region18: #{tpu_custom_call.1} parent=1 // pred_check
      _
    $region19: #{tpu_custom_call.1} parent=1 // pred_check_branch
      %39 = sbr.rel (0) target = $region21
    $region20: #{tpu_custom_call.1} parent=1 // pred_region
      %40 = dma.done [#allocation6], 256
    $region21: #{tpu_custom_call.1} parent=1 // pred_fallthru
      _
    %v41 = vld [vmem:[#allocation5] sm:$0xff]
    %v42 = vld [vmem:[#allocation5 + $0x8] sm:$0xff]
    %v43 = vld [vmem:[#allocation2] sm:$0x3]
    %v44 = vld [vmem:[%s2] sm:$0x3]
    %v47 = vunpack.c.l.s4 1966171168
    %v48 = vunpack.c.0.s8 %v47
    %v49 = vlaneseq
    %v50 = vshrl.u32 %v49, 7
    %v51 = vsub.s32 %v48, %v50
    %v52 = vrot.slane %v43, %v51
    %v53 = vcombine.high %v52, %v52
    %v55 = vunpack.c.l.s4 1966171168
    %v56 = vunpack.c.0.s8 %v55
    %v57 = vlaneseq
    %v58 = vshrl.u32 %v57, 7
    %v59 = vsub.s32 %v56, %v58
    %v60 = vrot.slane %v52, %v59
    %v62 = vunpack.c.l.s4 1966171168
    %v63 = vunpack.c.0.s8 %v62
    %v64 = vlaneseq
    %v65 = vshrl.u32 %v64, 7
    %v66 = vsub.s32 %v63, %v65
    %v67 = vrot.slane %v53, %v66
    %v68 = vlaneseq
    %v69 = vshrl.u32 %v68, 7
    %v70 = vsub.s32 0, %v69
    %v71 = vrot.slane %v60, %v70
    %v72 = vlaneseq
    %v73 = vshrl.u32 %v72, 7
    %v74 = vsub.s32 0, %v73
    %v75 = vrot.slane %v67, %v74
    %v78 = vmul.f32 %v41, %v71
    %v79 = vmul.f32 %v42, %v75
    %vm80 = vcmask 261120
    %v81 = vsel %vm80, %v78, 0.0
    %82 = vadd.xlane.f32.xlu0 %v81
    %v83 = vpop.xlane.xlu0 %82
    %v84 = vsel %vm80, %v79, 0.0
    %85 = vadd.xlane.f32.xlu0 %v84
    %v86 = vpop.xlane.xlu0 %85
    %vm87 = vcmp.ne.s32.totalorder %v44, 0
    %v90 = vlaneseq
    %v91 = vand.u32 %v90, 127
    %v92 = vlaneseq
    %v93 = vshrl.u32 %v92, 7
    %v94 = vsub.s32 %v91, %v93
    %v95 = vrot.slane %v83, %v94
    %v96 = vlaneseq
    %v97 = vshrl.u32 %v96, 7
    %v98 = vsub.s32 %v91, %v97
    %v99 = vrot.slane %v86, %v98
    %vm100 = vcmask 1041409
    %v101 = vsel %vm100, %v99, %v95
    %v103 = vsel %vm87, -1e+12, %v101
    %vm104 = vcmask 58368
    %v105 = vsel %vm104, %v103, -inf
    %106 = vmax.xlane.f32.xlu0 %v105
    %v107 = vpop.xlane.xlu0 %106
    %v108 = vsub.f32 %v103, %v107
    %v109 = vmul.f32 %v108, 1.442695
    %v110 = vpow.pop %v109
    %v111 = vsel %vm104, %v110, 0.0
    %112 = vadd.xlane.f32.xlu0 %v111
    %v113 = vpop.xlane.xlu0 %112
    %v114 = vrcp.pop %v113
    %v115 = vmul.f32 %v110, %v114
    %v116 = vlaneseq
    %v117 = vshrl.u32 %v116, 7
    %v118 = vsub.s32 0, %v117
    %v119 = vrot.slane %v115, %v118
    %121 = vbcast.lane.b32.xlu0 %v119, 256
    %v122 = vpop.permute.xlu0 %121
    %v123 = vlaneseq
    %v124 = vshrl.u32 %v123, 7
    %v125 = vsub.s32 1, %v124
    %v126 = vrot.slane %v115, %v125
    %128 = vbcast.lane.b32.xlu0 %v126, 256
    %v129 = vpop.permute.xlu0 %128
    %v130 = vmul.f32 %v122, %v41
    %v131 = vmul.f32 %v129, %v42
    %v132 = vsel %vm80, %v130, 0.0
    %v133 = vrot.slane %v132, 4
    %v134 = vadd.f32 %v132, %v133
    %v135 = vrot.slane %v134, 2
    %v136 = vadd.f32 %v134, %v135
    %v137 = vrot.slane %v136, 1
    %v138 = vadd.f32 %v136, %v137
    %v139 = vsel %vm80, %v131, 0.0
    %v140 = vrot.slane %v139, 4
    %v141 = vadd.f32 %v139, %v140
    %v142 = vrot.slane %v141, 2
    %v143 = vadd.f32 %v141, %v142
    %v144 = vrot.slane %v143, 1
    %v145 = vadd.f32 %v143, %v144
    %v148 = vsel %vm100, %v145, %v138
    %vm150 = vcmask 254976
    %151 = vst.msk [vmem:[#allocation7] sm:$0x3] %vm150, %v148
    // Predicated region
    $region22: #{tpu_custom_call.1} parent=1 // pred_check
      _
    $region23: #{tpu_custom_call.1} parent=1 // pred_check_branch
      %153 = sbr.rel (0) target = $region25
    $region24: #{tpu_custom_call.1} parent=1 // pred_region
      %s155 = ssub.s32 32, 32
      %156 = vsyncadd [#allocation4], %s155
      %s158 = sshll.u32 [#allocation7], 4
      %s159 = int_to_ptr.vmem [resolvable:$true] %s158
      %161 = dma.vmem_to_hbm [thread:$0]  %s159, 32, %s3, [#allocation4]
    $region25: #{tpu_custom_call.1} parent=1 // pred_fallthru
      _
    // Predicated region
    $region26: #{tpu_custom_call.1} parent=1 // pred_check
      _
    $region27: #{tpu_custom_call.1} parent=1 // pred_check_branch
      %163 = sbr.rel (0) target = $region29
    $region28: #{tpu_custom_call.1} parent=1 // pred_region
      %164 = dma.done [#allocation4], 32
    $region29: #{tpu_custom_call.1} parent=1 // pred_fallthru
      _
    %165 = vsyncpa [#allocation3], 1
    %166 = vsyncpa [#allocation6], 1
    %167 = vsyncpa [#allocation4], 1

</llo_original>
